<compile_context>
chip_gen: v7x
topology: tpu7x:2x2x1
jax: 0.10.0
libtpu: 0.0.40
codegen_flags: <defaults>
</compile_context>

<pallas_src>
import jax
import jax.numpy as jnp
from jax.experimental import pallas as pl
from jax.experimental.pallas import tpu as pltpu


def _identity_kernel(x_ref, o_ref):
    # Whole-tile VMEM load -> store.
    o_ref[...] = x_ref[...]


def _sublane_min(itemsize):
    """Minimum native sublane tile for the dtype (8/16/32 for 4/2/1 bytes)."""
    return {4: 8, 2: 16, 1: 32}.get(int(itemsize), 8)


def _vmem_plan():
    """(vmem_limit_bytes, per-tile target bytes) for the local TPU generation."""
    try:
        kind = jax.devices()[0].device_kind.lower()
    except Exception:  # pragma: no cover - defensive
        kind = ""
    if "v7" in kind:
        # v7x: 64 MiB physical VMEM per TC.  4 double-buffered 6 MiB tiles
        # stay under ~32 MiB; cap the scoped limit at 48 MiB.
        return 48 * 1024 * 1024, 6 * 1024 * 1024
    # v5e / v6e: 128 MiB physical VMEM -> larger stripes, fewer grid steps.
    return 64 * 1024 * 1024, 8 * 1024 * 1024


def _choose_2d_shape(shape):
    """Row-major 2-D factorization (rows, cols) of `shape`.

    Merge trailing dims until the minor (lane) axis is >= 128 so stores are
    lane-dense; otherwise keep the original last dim as the minor axis.
    """
    total = 1
    for d in shape:
        total *= int(d)
    cols = int(shape[-1])
    k = len(shape) - 1
    while cols < 128 and k > 1:
        k -= 1
        cols *= int(shape[k])
    rows = total // cols
    return rows, cols


def _plan_tiling(rows, cols, itemsize, target_bytes):
    """Return ('rows', tile_r, cols) or ('cols', tile_r, tile_c)."""
    sub = _sublane_min(itemsize)
    row_bytes = max(cols * itemsize, 1)
    tile_r = target_bytes // row_bytes

    if tile_r >= sub or tile_r >= rows:
        # Lane-dense row-stripe path: full column extent per block.
        tile_r = min(tile_r, rows)
        if tile_r >= sub:
            tile_r = (tile_r // sub) * sub  # dtype-native sublane alignment
        else:
            tile_r = rows  # tiny array: whole-array block (full extent is legal)
        # Guarantee >= 2 grid steps on large arrays so both v7x TensorCores
        # get a shard of the copy.
        if tile_r >= rows and rows >= 2 * sub:
            half = (rows + 1) // 2
            tile_r = ((half + sub - 1) // sub) * sub
            if tile_r >= rows:
                tile_r = max((rows // 2 // sub) * sub, sub)
        return "rows", int(min(tile_r, rows)), int(cols)

    # Column-tiling fallback: one full-width stripe would blow the VMEM budget.
    tile_r = rows if rows < sub else sub
    tile_c = (target_bytes // max(tile_r * itemsize, 1)) // 128 * 128
    tile_c = max(tile_c, 128)
    tile_c = min(tile_c, cols)  # if cols < 128 this is the full extent (legal)
    return "cols", int(tile_r), int(tile_c)


def my_model_forward(x):
    """Forward pass of MyModel: identity (see module docstring / TODO)."""
    if x.ndim == 0:
        # Nothing to tile; identity of a scalar is the scalar.
        return x

    orig_shape = x.shape
    if x.ndim == 1:
        rows, cols = 1, int(orig_shape[0])
    else:
        rows, cols = _choose_2d_shape(orig_shape)
    x2d = x.reshape(rows, cols)
    itemsize = x2d.dtype.itemsize

    vmem_limit, target_bytes = _vmem_plan()
    mode, tile_r, tile_c = _plan_tiling(rows, cols, itemsize, target_bytes)

    if mode == "rows":
        grid = (pl.cdiv(rows, tile_r),)
        in_specs = [pl.BlockSpec((tile_r, cols), lambda i: (i, 0))]
        out_specs = pl.BlockSpec((tile_r, cols), lambda i: (i, 0))
        dims = ("parallel",)
    else:
        grid = (pl.cdiv(rows, tile_r), pl.cdiv(cols, tile_c))
        in_specs = [pl.BlockSpec((tile_r, tile_c), lambda i, j: (i, j))]
        out_specs = pl.BlockSpec((tile_r, tile_c), lambda i, j: (i, j))
        dims = ("parallel", "parallel")

    total_bytes = rows * cols * itemsize

    y2d = pl.pallas_call(
        _identity_kernel,
        out_shape=jax.ShapeDtypeStruct((rows, cols), x2d.dtype),
        grid_spec=pltpu.PrefetchScalarGridSpec(
            num_scalar_prefetch=0,
            grid=grid,
            in_specs=in_specs,
            out_specs=out_specs,
        ),
        # Alias output onto the input: when the caller donates the buffer the
        # copy is in-place and adds no net HBM footprint.
        input_output_aliases={0: 0},
        cost_estimate=pl.CostEstimate(
            flops=0, transcendentals=0, bytes_accessed=2 * total_bytes),
        compiler_params=pltpu.CompilerParams(
            dimension_semantics=dims,
            vmem_limit_bytes=vmem_limit,
        ),
    )(x2d)

    return y2d.reshape(orig_shape)


if __name__ == "__main__":
    key = jax.random.PRNGKey(0)
    # Small deterministic input (batch=2, channels=4, spatial=16x16).
    x = jax.random.normal(key, (2, 4, 16, 16), dtype=jnp.float32)

    y = my_model_forward(x)
    jax.block_until_ready(y)

    # Sanity check: identity semantics.
    assert y.shape == x.shape and y.dtype == x.dtype
    assert bool(jnp.all(y == x))

    print("KERNEL_OK")
</pallas_src>

<mosaic_0001>
module attributes {stable_mosaic.version = 11 : i64} {
  func.func @_identity_kernel(%arg0: i32, %arg1: memref<8x256xf32, #tpu.memory_space<vmem>>, %arg2: memref<8x256xf32, #tpu.memory_space<vmem>>) attributes {dimension_semantics = [#tpu.dimension_semantics<parallel>], iteration_bounds = array<i64: 1>, scalar_prefetch = 0 : i64, scratch_operands = 0 : i64, tpu.core_type = #tpu.core_type<tc>, window_params = [{transform_indices = @transform_0, window_bounds = array<i64: 8, 256>}, {transform_indices = @transform_1, window_bounds = array<i64: 8, 256>}]} {
    %c0 = arith.constant 0 : index
    %c0_0 = arith.constant 0 : index
    %0 = vector.load %arg1[%c0, %c0_0] : memref<8x256xf32, #tpu.memory_space<vmem>>, vector<8x256xf32>
    %c0_1 = arith.constant 0 : index
    %c0_2 = arith.constant 0 : index
    %1 = vector.load %arg2[%c0_1, %c0_2] : memref<8x256xf32, #tpu.memory_space<vmem>>, vector<8x256xf32>
    tpu.vector_store %arg2[%c0_1, %c0_2], %0 {strides = array<i32>} : memref<8x256xf32, #tpu.memory_space<vmem>>, vector<8x256xf32>,
    return
  }
  func.func @transform_0(%arg0: i32) -> (i32, i32) {
    %c0_i32 = arith.constant 0 : i32
    %c0_i32_0 = arith.constant 0 : i32
    return %arg0, %c0_i32 : i32, i32
  }
  func.func @transform_1(%arg0: i32) -> (i32, i32) {
    %c0_i32 = arith.constant 0 : i32
    %c0_i32_0 = arith.constant 0 : i32
    return %arg0, %c0_i32 : i32, i32
  }
}

</mosaic_0001>

<llo_original>
// kernel: tpu_custom_call.1
$region0: #{tpu_custom_call.1}
  #allocation0 [shape = 'u32[]', space=smem, size = 0x4, offset = 0x4, fixed_abs, tag = 'smem constant byte address 0x4 - core index']
  #allocation1 [shape = 'u32[144,128]{1,0:T(1,128)}', space=vmem, size = 0x12000, scoped, tag = 'internal scratch']
  %s0 = inlined_call_operand.hbm [shape: f32[8,256], index: 0, kind: input, shape index: {}, may-alias: {0,1}]
  %s1 = inlined_call_operand.hbm [shape: f32[8,256], index: 1, kind: output, shape index: {}, may-alias: {0,1}]
  %s2 = sld [smem:[#allocation0]]
  $region18: #{tpu_custom_call.1} parent=0
    _
  %s4 = ssub.s32 1, %s2
  %s5 = scalar_select 0, %s4, %s2
  $region1: #{tpu_custom_call.1} parent=0
    #allocation2 [shape = 'u8[8192]{0}', space=vmem, size = 0x2000, scoped, tag = 'input window, operand 0, single buffered']
    #allocation3 [shape = 's32[1]{0}', space=sflag, size = 0x4, scoped, tag = 'scoped memory for tpu_custom_call.1']
    #allocation4 [shape = 's32[1]{0}', space=sflag, size = 0x4, scoped, tag = 'scoped memory for tpu_custom_call.1']
    #allocation5 [shape = 'u8[8192]{0}', space=vmem, size = 0x2000, scoped, tag = 'output window, operand 0, single buffered']
    %6 = vsyncpa [#allocation3], 0
    %7 = vsyncpa [#allocation4], 0
    // Predicated region
    $region2: #{tpu_custom_call.1} parent=1 // pred_check
      _
    $region3: #{tpu_custom_call.1} parent=1 // pred_check_branch
      %9 = sbr.rel (0) target = $region5
    $region4: #{tpu_custom_call.1} parent=1 // pred_region
      %s11 = ssub.s32 256, 256
      %12 = vsyncadd [#allocation3], %s11
      %s14 = sshll.u32 [#allocation2], 4
      %s15 = int_to_ptr.vmem [resolvable:$true] %s14
      %17 = dma.hbm_to_vmem [thread:$0]  %s0, 256, %s15, [#allocation3]
    $region5: #{tpu_custom_call.1} parent=1 // pred_fallthru
      _
    // Predicated region
    $region6: #{tpu_custom_call.1} parent=1 // pred_check
      _
    $region7: #{tpu_custom_call.1} parent=1 // pred_check_branch
      %19 = sbr.rel (0) target = $region9
    $region8: #{tpu_custom_call.1} parent=1 // pred_region
      %20 = dma.done [#allocation3], 256
    $region9: #{tpu_custom_call.1} parent=1 // pred_fallthru
      _
    %v21 = vld [vmem:[#allocation2] sm:$0xff]
    %v22 = vld [vmem:[#allocation2 + $0x8] sm:$0xff]
    %23 = vst [vmem:[#allocation5] sm:$0xff] %v21
    %24 = vst [vmem:[#allocation5 + $0x8] sm:$0xff] %v22
    // Predicated region
    $region10: #{tpu_custom_call.1} parent=1 // pred_check
      _
    $region11: #{tpu_custom_call.1} parent=1 // pred_check_branch
      %26 = sbr.rel (0) target = $region13
    $region12: #{tpu_custom_call.1} parent=1 // pred_region
      %s28 = ssub.s32 256, 256
      %29 = vsyncadd [#allocation4], %s28
      %s31 = sshll.u32 [#allocation5], 4
      %s32 = int_to_ptr.vmem [resolvable:$true] %s31
      %34 = dma.vmem_to_hbm [thread:$0]  %s32, 256, %s1, [#allocation4]
    $region13: #{tpu_custom_call.1} parent=1 // pred_fallthru
      _
    // Predicated region
    $region14: #{tpu_custom_call.1} parent=1 // pred_check
      _
    $region15: #{tpu_custom_call.1} parent=1 // pred_check_branch
      %36 = sbr.rel (0) target = $region17
    $region16: #{tpu_custom_call.1} parent=1 // pred_region
      %37 = dma.done [#allocation4], 256
    $region17: #{tpu_custom_call.1} parent=1 // pred_fallthru
      _
    %38 = vsyncpa [#allocation3], 1
    %39 = vsyncpa [#allocation4], 1

</llo_original>
